<compile_context>
chip_gen: v7x
topology: tpu7x:2x2x1
jax: 0.10.0
libtpu: 0.0.40
codegen_flags: <defaults>
</compile_context>

<pallas_src>
import math

import jax
import jax.numpy as jnp
from jax.experimental import pallas as pl
from jax.experimental.pallas import tpu as pltpu

_LANE = 128
_WIDTH_CANDIDATES = (2048, 1024, 512, 256, 128)   # lane-dense last dims
_BLOCK_BYTES_TARGET = 8 * 1024 * 1024             # ~8 MiB per block
_TARGET_STEPS = 4                                  # >= 2 steps per TC (v7x megacore)
_VMEM_LIMIT = 48 * 1024 * 1024                     # ~4x block + slack, < 64 MiB (v7x)


def _exp_kernel(x_ref, o_ref):
    # Pure elementwise: exp goes to the EUP slot; kernel is HBM-bandwidth bound.
    o_ref[...] = jnp.exp(x_ref[...])


def _cdiv(a: int, b: int) -> int:
    return -(-a // b)


def _round_up(n: int, m: int) -> int:
    return ((n + m - 1) // m) * m


def _exp_2d(x2d: jax.Array, rows: int, width: int, dtype) -> jax.Array:
    """Run the exp kernel on a (rows, width) slab; width is a multiple of 128."""
    itemsize = jnp.dtype(dtype).itemsize
    sub = max(8, 32 // itemsize)                  # 8 f32, 16 bf16, 32 int8/fp8
    cap = max(sub, (_BLOCK_BYTES_TARGET // (width * itemsize)) // sub * sub)

    # Aim for >= _TARGET_STEPS grid steps (pipelining + megacore), capped at
    # ~8 MiB per block for large tensors.
    tile_r = min(cap, _round_up(_cdiv(rows, _TARGET_STEPS), sub))
    if tile_r >= rows:
        tile_r = rows  # single full-extent block (full-dim block shape is always legal)

    grid = (_cdiv(rows, tile_r),)                 # ragged: last block masked by Pallas

    return pl.pallas_call(
        _exp_kernel,
        out_shape=jax.ShapeDtypeStruct((rows, width), dtype),
        grid_spec=pltpu.PrefetchScalarGridSpec(
            num_scalar_prefetch=0,
            grid=grid,
            in_specs=[pl.BlockSpec((tile_r, width), lambda i: (i, 0))],
            out_specs=pl.BlockSpec((tile_r, width), lambda i: (i, 0)),
        ),
        compiler_params=pltpu.CompilerParams(
            dimension_semantics=("parallel",),
            vmem_limit_bytes=_VMEM_LIMIT,
        ),
    )(x2d)


def exp_pallas(x: jax.Array) -> jax.Array:
    """Exact equivalent of `Exp.forward` on a concrete tensor: exp(x)."""
    orig_shape = x.shape

    # torch.exp promotes integral/bool inputs to floating point.
    if not jnp.issubdtype(x.dtype, jnp.floating):
        x = x.astype(jnp.float32)
    dtype = x.dtype

    total = int(math.prod(orig_shape))
    if total == 0:
        return jnp.exp(x)  # empty tensor: nothing to do

    xf = x.reshape(-1)

    # Common case: element count is a multiple of 128 -> free reshape to a
    # lane-dense (rows, width) slab, no padding, no output slice.
    width = next((w for w in _WIDTH_CANDIDATES if total % w == 0), None)
    if width is not None:
        rows = total // width
        out2d = _exp_2d(xf.reshape(rows, width), rows, width, dtype)
        return out2d.reshape(orig_shape)

    # Rare fallback: ragged element count. Pad by < 128 elements to the next
    # lane multiple (exp(0)=1 in the padding, sliced away afterwards).
    width = _LANE
    padded = _round_up(total, width)
    xf = jnp.pad(xf, (0, padded - total))
    rows = padded // width
    out2d = _exp_2d(xf.reshape(rows, width), rows, width, dtype)
    return out2d.reshape(-1)[:total].reshape(orig_shape)


# TODO(synk): the AbstractElement (DeepZ zonotope) branch of Exp.forward —
# x.exp(self.deepz_lambda, self.bounds) with in-place deepz_lambda parameter
# updates — is an abstract-interpretation transformer, not a tensor op; it has
# no clean Pallas equivalent and is not implemented here.


if __name__ == "__main__":
    key = jax.random.PRNGKey(0)
    # batch=2, channels=4, spatial=16x16 — elementwise exp over the tensor.
    x = jax.random.normal(key, (2, 4, 16, 16), dtype=jnp.float32)

    out = jax.block_until_ready(exp_pallas(x))
    ref = jnp.exp(x)
    assert out.shape == x.shape, out.shape
    assert out.dtype == x.dtype, out.dtype
    assert jnp.allclose(out, ref, atol=1e-6, rtol=1e-5), "mismatch vs reference"

    # Ragged element count (3*5*7 = 105, not a multiple of 128) exercises the
    # fallback pad/slice path.
    x2 = jax.random.normal(jax.random.PRNGKey(1), (3, 5, 7), dtype=jnp.float32)
    out2 = jax.block_until_ready(exp_pallas(x2))
    assert out2.shape == x2.shape
    assert jnp.allclose(out2, jnp.exp(x2), atol=1e-6, rtol=1e-5), "ragged mismatch"

    print("KERNEL_OK")
</pallas_src>

<mosaic_0001>
module attributes {stable_mosaic.version = 11 : i64} {
  func.func @_exp_kernel(%arg0: i32, %arg1: memref<1x2048xf32, #tpu.memory_space<vmem>>, %arg2: memref<1x2048xf32, #tpu.memory_space<vmem>>) attributes {dimension_semantics = [#tpu.dimension_semantics<parallel>], iteration_bounds = array<i64: 1>, scalar_prefetch = 0 : i64, scratch_operands = 0 : i64, tpu.core_type = #tpu.core_type<tc>, window_params = [{transform_indices = @transform_0, window_bounds = array<i64: 1, 2048>}, {transform_indices = @transform_1, window_bounds = array<i64: 1, 2048>}]} {
    %c0 = arith.constant 0 : index
    %c0_0 = arith.constant 0 : index
    %0 = vector.load %arg1[%c0, %c0_0] : memref<1x2048xf32, #tpu.memory_space<vmem>>, vector<1x2048xf32>
    %1 = math.exp %0 : vector<1x2048xf32>
    %c0_1 = arith.constant 0 : index
    %c0_2 = arith.constant 0 : index
    %2 = vector.load %arg2[%c0_1, %c0_2] : memref<1x2048xf32, #tpu.memory_space<vmem>>, vector<1x2048xf32>
    tpu.vector_store %arg2[%c0_1, %c0_2], %1 {strides = array<i32>} : memref<1x2048xf32, #tpu.memory_space<vmem>>, vector<1x2048xf32>,
    return
  }
  func.func @transform_0(%arg0: i32) -> (i32, i32) {
    %c0_i32 = arith.constant 0 : i32
    %c0_i32_0 = arith.constant 0 : i32
    return %arg0, %c0_i32 : i32, i32
  }
  func.func @transform_1(%arg0: i32) -> (i32, i32) {
    %c0_i32 = arith.constant 0 : i32
    %c0_i32_0 = arith.constant 0 : i32
    return %arg0, %c0_i32 : i32, i32
  }
}

</mosaic_0001>

<llo_original>
// kernel: tpu_custom_call.1
$region0: #{tpu_custom_call.1}
  #allocation0 [shape = 'u32[]', space=smem, size = 0x4, offset = 0x4, fixed_abs, tag = 'smem constant byte address 0x4 - core index']
  #allocation1 [shape = 'u32[144,128]{1,0:T(1,128)}', space=vmem, size = 0x12000, scoped, tag = 'internal scratch']
  %s0 = inlined_call_operand.hbm [shape: f32[1,2048], index: 0, kind: input, shape index: {}]
  %s1 = inlined_call_operand.hbm [shape: f32[1,2048], index: 1, kind: output, shape index: {}]
  %s2 = sld [smem:[#allocation0]]
  $region18: #{tpu_custom_call.1} parent=0
    _
  %s4 = ssub.s32 1, %s2
  %s5 = scalar_select 0, %s4, %s2
  $region1: #{tpu_custom_call.1} parent=0
    #allocation2 [shape = 'u8[8192]{0}', space=vmem, size = 0x2000, scoped, tag = 'input window, operand 0, single buffered']
    #allocation3 [shape = 's32[1]{0}', space=sflag, size = 0x4, scoped, tag = 'scoped memory for tpu_custom_call.1']
    #allocation4 [shape = 's32[1]{0}', space=sflag, size = 0x4, scoped, tag = 'scoped memory for tpu_custom_call.1']
    #allocation5 [shape = 'u8[8192]{0}', space=vmem, size = 0x2000, scoped, tag = 'output window, operand 0, single buffered']
    %6 = vsyncpa [#allocation3], 0
    %7 = vsyncpa [#allocation4], 0
    // Predicated region
    $region2: #{tpu_custom_call.1} parent=1 // pred_check
      _
    $region3: #{tpu_custom_call.1} parent=1 // pred_check_branch
      %9 = sbr.rel (0) target = $region5
    $region4: #{tpu_custom_call.1} parent=1 // pred_region
      %s11 = ssub.s32 256, 256
      %12 = vsyncadd [#allocation3], %s11
      %s14 = sshll.u32 [#allocation2], 4
      %s15 = int_to_ptr.vmem [resolvable:$true] %s14
      %17 = dma.hbm_to_vmem [thread:$0]  %s0, 256, %s15, [#allocation3]
    $region5: #{tpu_custom_call.1} parent=1 // pred_fallthru
      _
    // Predicated region
    $region6: #{tpu_custom_call.1} parent=1 // pred_check
      _
    $region7: #{tpu_custom_call.1} parent=1 // pred_check_branch
      %19 = sbr.rel (0) target = $region9
    $region8: #{tpu_custom_call.1} parent=1 // pred_region
      %20 = dma.done [#allocation3], 256
    $region9: #{tpu_custom_call.1} parent=1 // pred_fallthru
      _
    %v21 = vld [vmem:[#allocation2] sm:$0xff]
    %v22 = vld [vmem:[#allocation2 + $0x8] sm:$0xff]
    %v23 = vmul.f32 %v21, 1.442695
    %v24 = vpow.pop %v23
    %v25 = vmul.f32 %v22, 1.442695
    %v26 = vpow.pop %v25
    %27 = vst [vmem:[#allocation5] sm:$0xff] %v24
    %28 = vst [vmem:[#allocation5 + $0x8] sm:$0xff] %v26
    // Predicated region
    $region10: #{tpu_custom_call.1} parent=1 // pred_check
      _
    $region11: #{tpu_custom_call.1} parent=1 // pred_check_branch
      %30 = sbr.rel (0) target = $region13
    $region12: #{tpu_custom_call.1} parent=1 // pred_region
      %s32 = ssub.s32 256, 256
      %33 = vsyncadd [#allocation4], %s32
      %s35 = sshll.u32 [#allocation5], 4
      %s36 = int_to_ptr.vmem [resolvable:$true] %s35
      %38 = dma.vmem_to_hbm [thread:$0]  %s36, 256, %s1, [#allocation4]
    $region13: #{tpu_custom_call.1} parent=1 // pred_fallthru
      _
    // Predicated region
    $region14: #{tpu_custom_call.1} parent=1 // pred_check
      _
    $region15: #{tpu_custom_call.1} parent=1 // pred_check_branch
      %40 = sbr.rel (0) target = $region17
    $region16: #{tpu_custom_call.1} parent=1 // pred_region
      %41 = dma.done [#allocation4], 256
    $region17: #{tpu_custom_call.1} parent=1 // pred_fallthru
      _
    %42 = vsyncpa [#allocation3], 1
    %43 = vsyncpa [#allocation4], 1

</llo_original>
